<compile_context>
chip_gen: v5e
topology: v5e:2x2
jax: 0.10.0
libtpu: 0.0.40
codegen_flags: <defaults>
</compile_context>

<pallas_src>
import functools

import jax
import jax.numpy as jnp
from jax.experimental import pallas as pl
from jax.experimental.pallas import tpu as pltpu

LANE = 128   # lane width (last-dim alignment for MXU / lane-dense stores)
SUB = 8      # f32 sublane width


def _round_up(x, m):
    return ((x + m - 1) // m) * m


def _vmem_capacity_bytes():
    try:
        return int(pltpu.get_tpu_info().vmem_capacity_bytes)
    except Exception:
        return 64 << 20   # conservative (v7x per-TensorCore VMEM)


_VMEM_CAP = _vmem_capacity_bytes()


def _pad_cast(x, shape, dtype):
    """Cast + zero-pad in one fused op; skip the pad entirely if aligned."""
    x = x.astype(dtype)
    if tuple(x.shape) == tuple(shape):
        return x
    out = jnp.zeros(shape, dtype)
    return out.at[tuple(slice(0, s) for s in x.shape)].set(x)


def _make_attention_kernel(p_true, a_chunk, e_chunk):
    """p_true = real (unpadded) number of pixels; chunks are static ints."""

    def kernel(enc_ref, dec_ref,
               we_ref, be_ref, wd_ref, bd_ref, wf_ref, bf_ref,
               awe_ref, alpha_ref):
        # enc_ref: (TB, Pp, Ep) in the MXU dtype (bf16 by default)
        tb, pp, ep = enc_ref.shape
        ap = we_ref.shape[1]
        mxu_dtype = we_ref.dtype

        # --- decoder projection: small MXU matmul, f32 accumulation ----------
        att2 = jnp.dot(dec_ref[...].astype(mxu_dtype), wd_ref[...],
                       preferred_element_type=jnp.float32) + be_zero_like0 \
            if False else \
            jnp.dot(dec_ref[...].astype(mxu_dtype), wd_ref[...],
                    preferred_element_type=jnp.float32) + bd_ref[...]   # (TB, Ap)

        # Encoder tile loaded once (MXU dtype), flattened for 2-D MXU matmuls.
        enc_mm = enc_ref[...].reshape(tb * pp, ep)                       # (TB*Pp, Ep)

        # --- chunked encoder projection + relu + full_att contraction --------
        # Never materialize the full (TB, Pp, Ap) att1 / s tensors.
        att = jnp.zeros((tb, pp), jnp.float32)
        for c0 in range(0, ap, a_chunk):
            c1 = c0 + a_chunk
            att1_c = jnp.dot(enc_mm, we_ref[:, c0:c1],
                             preferred_element_type=jnp.float32)         # (TB*Pp, ch)
            att1_c = att1_c.reshape(tb, pp, a_chunk)
            s_c = jnp.maximum(att1_c
                              + be_ref[:, c0:c1][:, None, :]
                              + att2[:, c0:c1][:, None, :], 0.0)          # (TB,Pp,ch)
            wf_c = wf_ref[:, c0:c1][:, None, :]                           # (1,1,ch) f32
            att = att + jnp.sum(s_c * wf_c, axis=-1)                      # (TB, Pp)
        att = att + bf_ref[0, 0]

        # Mask padded pixel columns (only if P was actually padded).
        if p_true < pp:
            col = jax.lax.broadcasted_iota(jnp.int32, att.shape, 1)
            att = jnp.where(col < p_true, att, jnp.float32(-1e30))

        # --- softmax over the pixel axis (f32, EUP reciprocal) ---------------
        m = jnp.max(att, axis=-1, keepdims=True)
        e = jnp.exp(att - m)
        denom = jnp.sum(e, axis=-1, keepdims=True)
        alpha = e * pl.reciprocal(denom, approx=True)                     # (TB, Pp)
        alpha_ref[...] = alpha.astype(alpha_ref.dtype)

        # --- alpha-weighted encoding: VPU mul + sublane reduce, chunked on E -
        # Reuses the (bf16) encoder tile with an on-the-fly f32 upcast.
        for e0 in range(0, ep, e_chunk):
            e1 = e0 + e_chunk
            enc_c = enc_ref[:, :, e0:e1].astype(jnp.float32)              # (TB,Pp,ch)
            awe_ref[:, e0:e1] = jnp.sum(enc_c * alpha[:, :, None],
                                        axis=1).astype(awe_ref.dtype)

    # (the `if False else` above is only to keep one expression; remove noise)
    be_zero_like0 = 0.0  # never used
    return kernel


def prepare_params(params, use_bf16_matmul=True):
    """Pad + cast the weights ONCE (hoisted out of the per-call path)."""
    we, be, wd, bd, wf, bf = params
    E, A = we.shape
    D = wd.shape[0]
    mxu_dtype = jnp.bfloat16 if use_bf16_matmul else jnp.float32
    Ep, Ap, Dp = _round_up(E, LANE), _round_up(A, LANE), _round_up(D, LANE)

    we_p = _pad_cast(we, (Ep, Ap), mxu_dtype)
    wd_p = _pad_cast(wd, (Dp, Ap), mxu_dtype)
    be_p = _pad_cast(be.reshape(1, A), (1, Ap), jnp.float32)
    bd_p = _pad_cast(bd.reshape(1, A), (1, Ap), jnp.float32)
    wf_row = _pad_cast(wf.reshape(1, A), (1, Ap), jnp.float32)
    bf_s = bf.reshape(1, 1).astype(jnp.float32)          # scalar -> SMEM
    return we_p, be_p, wd_p, bd_p, wf_row, bf_s


@functools.partial(jax.jit, static_argnames=("batch_tile",))
def attention_forward(encoder_out, decoder_hidden, prepared_params,
                      batch_tile=16):
    we_p, be_p, wd_p, bd_p, wf_row, bf_s = prepared_params
    mxu_dtype = we_p.dtype
    mxu_bytes = jnp.dtype(mxu_dtype).itemsize

    B, P, E = encoder_out.shape
    D = decoder_hidden.shape[1]
    Ep, Ap = we_p.shape
    Dp = wd_p.shape[0]

    # Pixel dim: sublane-only padding (8 for f32, 16 for bf16 tiles).
    sub_p = 16 if mxu_bytes == 2 else SUB
    Pp = _round_up(P, sub_p)

    # Batch tiling: multiple of 8; prefer >= 2 grid steps (megacore + pipelining).
    TB = _round_up(min(batch_tile, max(B, 1)), SUB)
    Bp = _round_up(B, TB)
    while Bp // TB < 2 and TB > SUB:
        TB -= SUB
        Bp = _round_up(B, TB)
    grid = (Bp // TB,)

    # Static chunk sizes for the in-kernel A / E loops.
    a_chunk = 256 if Ap % 256 == 0 else 128
    e_chunk = 512 if Ep % 512 == 0 else (256 if Ep % 256 == 0 else 128)

    # Fused pad + cast of the activations (skipped entirely if aligned).
    enc_p = _pad_cast(encoder_out, (Bp, Pp, Ep), mxu_dtype)
    dec_p = _pad_cast(decoder_hidden, (Bp, Dp), jnp.float32)

    # VMEM budget: double-buffered I/O tiles + pinned weights + in-kernel
    # intermediates, clamped against the real per-core VMEM capacity.
    tile_io = 2 * (TB * Pp * Ep * mxu_bytes + TB * Dp * 4
                   + TB * Ep * 4 + TB * Pp * 4)
    weights = 2 * ((Ep + Dp) * Ap * mxu_bytes + 3 * Ap * 4)
    interm = 4 * (3 * TB * Pp * a_chunk + 2 * TB * Pp * e_chunk
                  + 2 * TB * Ap + 4 * TB * Pp)
    vmem_limit = int(max(min(tile_io + weights + interm + (8 << 20),
                             _VMEM_CAP - (12 << 20)),
                         16 << 20))

    awe_p, alpha_p = pl.pallas_call(
        _make_attention_kernel(P, a_chunk, e_chunk),
        out_shape=(
            jax.ShapeDtypeStruct((Bp, Ep), jnp.float32),   # attention_weighted_encoding
            jax.ShapeDtypeStruct((Bp, Pp), jnp.float32),   # alpha
        ),
        grid=grid,
        in_specs=[
            pl.BlockSpec((TB, Pp, Ep), lambda i: (i, 0, 0)),   # encoder tile (mxu dtype)
            pl.BlockSpec((TB, Dp), lambda i: (i, 0)),          # decoder tile (f32)
            pl.BlockSpec((Ep, Ap), lambda i: (0, 0)),          # W_enc (pinned)
            pl.BlockSpec((1, Ap), lambda i: (0, 0)),           # b_enc
            pl.BlockSpec((Dp, Ap), lambda i: (0, 0)),          # W_dec (pinned)
            pl.BlockSpec((1, Ap), lambda i: (0, 0)),           # b_dec
            pl.BlockSpec((1, Ap), lambda i: (0, 0)),           # w_full (row vector)
            pl.BlockSpec(memory_space=pltpu.MemorySpace.SMEM), # b_full scalar
        ],
        out_specs=(
            pl.BlockSpec((TB, Ep), lambda i: (i, 0)),
            pl.BlockSpec((TB, Pp), lambda i: (i, 0)),
        ),
        compiler_params=pltpu.CompilerParams(
            dimension_semantics=("parallel",),
            vmem_limit_bytes=vmem_limit,
        ),
    )(enc_p, dec_p, we_p, be_p, wd_p, bd_p, wf_row, bf_s)

    return awe_p[:B, :E], alpha_p[:B, :P]


def init_params(key, encoder_dim, decoder_dim, attention_dim):
    """Deterministic init (nn.Linear-style uniform). Weights stored pre-transposed
    so the kernel does x @ W (W has shape (in_features, out_features))."""
    k1, k2, k3, k4, k5, k6 = jax.random.split(key, 6)

    def lin(kw, kb, fan_in, fan_out):
        bound = 1.0 / jnp.sqrt(fan_in)
        w = jax.random.uniform(kw, (fan_in, fan_out), jnp.float32, -bound, bound)
        b = jax.random.uniform(kb, (1, fan_out), jnp.float32, -bound, bound)
        return w, b

    we, be = lin(k1, k2, encoder_dim, attention_dim)
    wd, bd = lin(k3, k4, decoder_dim, attention_dim)
    wf, bf = lin(k5, k6, attention_dim, 1)
    bf = bf.reshape(1, 1)
    return we, be, wd, bd, wf, bf


def attention_ref(encoder_out, decoder_hidden, params):
    """Pure-JAX reference mirroring the PyTorch forward."""
    we, be, wd, bd, wf, bf = params
    att1 = encoder_out @ we + be[0]                       # (B, P, A)
    att2 = decoder_hidden @ wd + bd[0]                    # (B, A)
    att = (jnp.maximum(att1 + att2[:, None, :], 0.0) @ wf)[..., 0] + bf[0, 0]
    alpha = jax.nn.softmax(att, axis=1)                   # (B, P)
    awe = jnp.sum(encoder_out * alpha[:, :, None], axis=1)
    return awe, alpha


if __name__ == "__main__":
    B, P = 2, 16                 # batch, num_pixels
    encoder_dim, decoder_dim, attention_dim = 32, 24, 32

    key = jax.random.PRNGKey(0)
    k_enc, k_dec, k_par = jax.random.split(key, 3)

    encoder_out = jax.random.normal(k_enc, (B, P, encoder_dim), jnp.float32)
    decoder_hidden = jax.random.normal(k_dec, (B, decoder_dim), jnp.float32)
    params = init_params(k_par, encoder_dim, decoder_dim, attention_dim)

    awe_gold, alpha_gold = attention_ref(encoder_out, decoder_hidden, params)

    # f32 MXU path (tight tolerance; loosened slightly for the EUP approx reciprocal)
    prep_f32 = prepare_params(params, use_bf16_matmul=False)
    awe32, alpha32 = attention_forward(encoder_out, decoder_hidden, prep_f32)
    awe32, alpha32 = jax.block_until_ready((awe32, alpha32))
    assert jnp.allclose(awe32, awe_gold, atol=1e-3, rtol=1e-3)
    assert jnp.allclose(alpha32, alpha_gold, atol=1e-3, rtol=1e-3)

    # bf16 path (production default: bf16 encoder/weights in HBM, f32 accumulation)
    prep_bf16 = prepare_params(params, use_bf16_matmul=True)
    awe, alpha = attention_forward(encoder_out, decoder_hidden, prep_bf16)
    awe, alpha = jax.block_until_ready((awe, alpha))
    assert jnp.allclose(awe, awe_gold, atol=2e-2, rtol=2e-2)
    assert jnp.allclose(alpha, alpha_gold, atol=2e-2, rtol=2e-2)

    print("KERNEL_OK")
</pallas_src>

<mosaic_0001>
module attributes {stable_mosaic.version = 11 : i64} {
  func.func @kernel(%arg0: i32, %arg1: memref<8x16x128xf32, #tpu.memory_space<vmem>>, %arg2: memref<8x128xf32, #tpu.memory_space<vmem>>, %arg3: memref<128x128xf32, #tpu.memory_space<vmem>>, %arg4: memref<1x128xf32, #tpu.memory_space<vmem>>, %arg5: memref<128x128xf32, #tpu.memory_space<vmem>>, %arg6: memref<1x128xf32, #tpu.memory_space<vmem>>, %arg7: memref<1x128xf32, #tpu.memory_space<vmem>>, %arg8: memref<1x1xf32, #tpu.memory_space<smem>>, %arg9: memref<8x128xf32, #tpu.memory_space<vmem>>, %arg10: memref<8x16xf32, #tpu.memory_space<vmem>>) attributes {dimension_semantics = [#tpu.dimension_semantics<parallel>], iteration_bounds = array<i64: 1>, scalar_prefetch = 0 : i64, scratch_operands = 0 : i64, tpu.core_type = #tpu.core_type<tc>, window_params = [{transform_indices = @transform_0, window_bounds = array<i64: 8, 16, 128>}, {transform_indices = @transform_1, window_bounds = array<i64: 8, 128>}, {pipeline_mode = #tpu.pipeline_mode<synchronous>, transform_indices = @transform_2, window_bounds = array<i64: 128, 128>}, {pipeline_mode = #tpu.pipeline_mode<synchronous>, transform_indices = @transform_3, window_bounds = array<i64: 1, 128>}, {pipeline_mode = #tpu.pipeline_mode<synchronous>, transform_indices = @transform_4, window_bounds = array<i64: 128, 128>}, {pipeline_mode = #tpu.pipeline_mode<synchronous>, transform_indices = @transform_5, window_bounds = array<i64: 1, 128>}, {pipeline_mode = #tpu.pipeline_mode<synchronous>, transform_indices = @transform_6, window_bounds = array<i64: 1, 128>}, {transform_indices = @transform_7, window_bounds = array<i64: 1, 1>}, {transform_indices = @transform_8, window_bounds = array<i64: 8, 128>}, {transform_indices = @transform_9, window_bounds = array<i64: 8, 16>}]} {
    %c0 = arith.constant 0 : index
    %c0_0 = arith.constant 0 : index
    %0 = vector.load %arg2[%c0, %c0_0] : memref<8x128xf32, #tpu.memory_space<vmem>>, vector<8x128xf32>
    %c0_1 = arith.constant 0 : index
    %c0_2 = arith.constant 0 : index
    %1 = vector.load %arg5[%c0_1, %c0_2] : memref<128x128xf32, #tpu.memory_space<vmem>>, vector<128x128xf32>
    %cst = arith.constant dense<0.000000e+00> : vector<8x128xf32>
    %2 = tpu.matmul %0, %1, %cst {dimension_numbers = #tpu.dot_dimension_numbers<[1], [0], [0], [1], [0, 0, 1, 1], [], []>} : vector<8x128xf32>, vector<128x128xf32>, vector<8x128xf32> -> vector<8x128xf32>
    %c0_3 = arith.constant 0 : index
    %c0_4 = arith.constant 0 : index
    %3 = vector.load %arg6[%c0_3, %c0_4] : memref<1x128xf32, #tpu.memory_space<vmem>>, vector<1x128xf32>
    %4 = vector.broadcast %3 : vector<1x128xf32> to vector<8x128xf32>
    %5 = arith.addf %2, %4 : vector<8x128xf32>
    %c0_5 = arith.constant 0 : index
    %c0_6 = arith.constant 0 : index
    %c0_7 = arith.constant 0 : index
    %6 = vector.load %arg1[%c0_5, %c0_6, %c0_7] : memref<8x16x128xf32, #tpu.memory_space<vmem>>, vector<8x16x128xf32>
    %7 = vector.shape_cast %6 : vector<8x16x128xf32> to vector<128x128xf32>
    %cst_8 = arith.constant 0.000000e+00 : f32
    %8 = vector.broadcast %cst_8 : f32 to vector<8x16xf32>
    %c0_9 = arith.constant 0 : index
    %c0_10 = arith.constant 0 : index
    %9 = vector.load %arg3[%c0_9, %c0_10] : memref<128x128xf32, #tpu.memory_space<vmem>>, vector<128x128xf32>
    %cst_11 = arith.constant dense<0.000000e+00> : vector<128x128xf32>
    %10 = tpu.matmul %7, %9, %cst_11 {dimension_numbers = #tpu.dot_dimension_numbers<[1], [0], [0], [1], [0, 0, 1, 1], [], []>} : vector<128x128xf32>, vector<128x128xf32>, vector<128x128xf32> -> vector<128x128xf32>
    %11 = vector.shape_cast %10 : vector<128x128xf32> to vector<8x16x128xf32>
    %c0_12 = arith.constant 0 : index
    %c0_13 = arith.constant 0 : index
    %12 = vector.load %arg4[%c0_12, %c0_13] : memref<1x128xf32, #tpu.memory_space<vmem>>, vector<1x128xf32>
    %13 = vector.shape_cast %12 : vector<1x128xf32> to vector<1x1x128xf32>
    %14 = vector.broadcast %13 : vector<1x1x128xf32> to vector<8x16x128xf32>
    %15 = arith.addf %11, %14 : vector<8x16x128xf32>
    %16 = vector.shape_cast %5 : vector<8x128xf32> to vector<8x1x128xf32>
    %17 = vector.broadcast %16 : vector<8x1x128xf32> to vector<8x16x128xf32>
    %18 = arith.addf %15, %17 : vector<8x16x128xf32>
    %cst_14 = arith.constant 0.000000e+00 : f32
    %19 = vector.broadcast %cst_14 : f32 to vector<8x16x128xf32>
    %20 = arith.maximumf %18, %19 : vector<8x16x128xf32>
    %c0_15 = arith.constant 0 : index
    %c0_16 = arith.constant 0 : index
    %21 = vector.load %arg7[%c0_15, %c0_16] : memref<1x128xf32, #tpu.memory_space<vmem>>, vector<1x128xf32>
    %22 = vector.shape_cast %21 : vector<1x128xf32> to vector<1x1x128xf32>
    %23 = vector.broadcast %22 : vector<1x1x128xf32> to vector<8x16x128xf32>
    %24 = arith.mulf %20, %23 : vector<8x16x128xf32>
    %cst_17 = arith.constant dense<0.000000e+00> : vector<8x16xf32>
    %25 = vector.multi_reduction <add>, %24, %cst_17 [2] : vector<8x16x128xf32> to vector<8x16xf32>
    %26 = arith.addf %8, %25 : vector<8x16xf32>
    %c0_18 = arith.constant 0 : index
    %c0_19 = arith.constant 0 : index
    %27 = memref.load %arg8[%c0_18, %c0_19] : memref<1x1xf32, #tpu.memory_space<smem>>
    %28 = vector.broadcast %27 : f32 to vector<8x16xf32>
    %29 = arith.addf %26, %28 : vector<8x16xf32>
    %cst_20 = arith.constant dense<0xFF800000> : vector<8xf32>
    %30 = vector.multi_reduction <maximumf>, %29, %cst_20 [1] : vector<8x16xf32> to vector<8xf32>
    %31 = vector.shape_cast %30 : vector<8xf32> to vector<8x1xf32>
    %32 = vector.broadcast %31 : vector<8x1xf32> to vector<8x16xf32>
    %33 = arith.subf %29, %32 : vector<8x16xf32>
    %34 = math.exp %33 : vector<8x16xf32>
    %cst_21 = arith.constant dense<0.000000e+00> : vector<8xf32>
    %35 = vector.multi_reduction <add>, %34, %cst_21 [1] : vector<8x16xf32> to vector<8xf32>
    %36 = vector.shape_cast %35 : vector<8xf32> to vector<8x1xf32>
    %37 = tpu.reciprocal %36 {approx = true} : vector<8x1xf32> -> vector<8x1xf32>
    %38 = vector.broadcast %37 : vector<8x1xf32> to vector<8x16xf32>
    %39 = arith.mulf %34, %38 : vector<8x16xf32>
    %c0_22 = arith.constant 0 : index
    %c0_23 = arith.constant 0 : index
    %40 = vector.load %arg10[%c0_22, %c0_23] : memref<8x16xf32, #tpu.memory_space<vmem>>, vector<8x16xf32>
    tpu.vector_store %arg10[%c0_22, %c0_23], %39 {strides = array<i32>} : memref<8x16xf32, #tpu.memory_space<vmem>>, vector<8x16xf32>,
    %c0_24 = arith.constant 0 : index
    %c0_25 = arith.constant 0 : index
    %c0_26 = arith.constant 0 : index
    %41 = vector.load %arg1[%c0_24, %c0_25, %c0_26] : memref<8x16x128xf32, #tpu.memory_space<vmem>>, vector<8x16x128xf32>
    %42 = vector.shape_cast %39 : vector<8x16xf32> to vector<8x16x1xf32>
    %43 = vector.broadcast %42 : vector<8x16x1xf32> to vector<8x16x128xf32>
    %44 = arith.mulf %41, %43 : vector<8x16x128xf32>
    %cst_27 = arith.constant dense<0.000000e+00> : vector<8x128xf32>
    %45 = vector.multi_reduction <add>, %44, %cst_27 [1] : vector<8x16x128xf32> to vector<8x128xf32>
    %c0_28 = arith.constant 0 : index
    %c0_29 = arith.constant 0 : index
    %46 = vector.load %arg9[%c0_28, %c0_29] : memref<8x128xf32, #tpu.memory_space<vmem>>, vector<8x128xf32>
    tpu.vector_store %arg9[%c0_28, %c0_29], %45 {strides = array<i32>} : memref<8x128xf32, #tpu.memory_space<vmem>>, vector<8x128xf32>,
    return
  }
  func.func @transform_0(%arg0: i32) -> (i32, i32, i32) {
    %c0_i32 = arith.constant 0 : i32
    %c0_i32_0 = arith.constant 0 : i32
    %c0_i32_1 = arith.constant 0 : i32
    return %arg0, %c0_i32, %c0_i32_0 : i32, i32, i32
  }
  func.func @transform_1(%arg0: i32) -> (i32, i32) {
    %c0_i32 = arith.constant 0 : i32
    %c0_i32_0 = arith.constant 0 : i32
    return %arg0, %c0_i32 : i32, i32
  }
  func.func @transform_2(%arg0: i32) -> (i32, i32) {
    %c0_i32 = arith.constant 0 : i32
    %c0_i32_0 = arith.constant 0 : i32
    %c0_i32_1 = arith.constant 0 : i32
    return %c0_i32, %c0_i32_0 : i32, i32
  }
  func.func @transform_3(%arg0: i32) -> (i32, i32) {
    %c0_i32 = arith.constant 0 : i32
    %c0_i32_0 = arith.constant 0 : i32
    %c0_i32_1 = arith.constant 0 : i32
    return %c0_i32, %c0_i32_0 : i32, i32
  }
  func.func @transform_4(%arg0: i32) -> (i32, i32) {
    %c0_i32 = arith.constant 0 : i32
    %c0_i32_0 = arith.constant 0 : i32
    %c0_i32_1 = arith.constant 0 : i32
    return %c0_i32, %c0_i32_0 : i32, i32
  }
  func.func @transform_5(%arg0: i32) -> (i32, i32) {
    %c0_i32 = arith.constant 0 : i32
    %c0_i32_0 = arith.constant 0 : i32
    %c0_i32_1 = arith.constant 0 : i32
    return %c0_i32, %c0_i32_0 : i32, i32
  }
  func.func @transform_6(%arg0: i32) -> (i32, i32) {
    %c0_i32 = arith.constant 0 : i32
    %c0_i32_0 = arith.constant 0 : i32
    %c0_i32_1 = arith.constant 0 : i32
    return %c0_i32, %c0_i32_0 : i32, i32
  }
  func.func @transform_7(%arg0: i32) -> (i32, i32) {
    %c0_i32 = arith.constant 0 : i32
    %c0_i32_0 = arith.constant 0 : i32
    %c0_i32_1 = arith.constant 0 : i32
    return %c0_i32, %c0_i32_0 : i32, i32
  }
  func.func @transform_8(%arg0: i32) -> (i32, i32) {
    %c0_i32 = arith.constant 0 : i32
    %c0_i32_0 = arith.constant 0 : i32
    return %arg0, %c0_i32 : i32, i32
  }
  func.func @transform_9(%arg0: i32) -> (i32, i32) {
    %c0_i32 = arith.constant 0 : i32
    %c0_i32_0 = arith.constant 0 : i32
    return %arg0, %c0_i32 : i32, i32
  }
}

</mosaic_0001>

<llo_original>
// kernel: attention_forward.1
$region0: #{attention_forward.1}
  #allocation0 [shape = 'u32[]', space=smem, size = 0x4, offset = 0x4, fixed_abs, tag = 'smem constant byte address 0x4 - core index']
  #allocation1 [shape = 'u32[72,128]{1,0:T(1,128)}', space=vmem, size = 0x9000, scoped, tag = 'internal scratch']
  #allocation2 [shape = 'f32[1,1]{1,0:T(1,128)S(6)}', space=smem, size = 0x200, scoped, tag = 'scoped memory for attention_forward.1']
  %s0 = inlined_call_operand.vmem [shape: f32[8,16,128], index: 0, kind: input, shape index: {}]
  %s1 = inlined_call_operand.vmem [shape: f32[8,128], index: 1, kind: input, shape index: {}]
  %s2 = inlined_call_operand.vmem [shape: f32[128,128], index: 2, kind: input, shape index: {}]
  %s3 = inlined_call_operand.vmem [shape: f32[1,128], index: 3, kind: input, shape index: {}]
  %s4 = inlined_call_operand.hbm [shape: f32[128,128], index: 4, kind: input, shape index: {}]
  %s5 = inlined_call_operand.vmem [shape: f32[1,128], index: 5, kind: input, shape index: {}]
  %s6 = inlined_call_operand.vmem [shape: f32[1,128], index: 6, kind: input, shape index: {}]
  %s7 = inlined_call_operand.<no memory space> [shape: f32[1,1], index: 7, kind: input, shape index: {}]
  %s8 = inlined_call_operand.vmem [shape: f32[8,128], index: 8, kind: output, shape index: {0}]
  %s9 = inlined_call_operand.vmem [shape: f32[8,16], index: 9, kind: output, shape index: {1}]
  %10 = xla_tuple %s8, %s9
  %s11 = sld [smem:[#allocation0]]
  $region54: #{attention_forward.1} parent=0
    _
  %s13 = ssub.s32 1, %s11
  %s14 = scalar_select 0, %s13, %s11
  %15 = sst [smem:[#allocation2]] %s7
  $region1: #{attention_forward.1} parent=0
    #allocation3 [shape = 'u8[65536]{0}', space=vmem, size = 0x10000, scoped, tag = 'input window, operand 4, single buffered']
    #allocation4 [shape = 's32[1]{0}', space=sflag, size = 0x4, scoped, tag = 'scoped memory for attention_forward.1']
    %16 = vsyncpa [#allocation4], 0
    // Predicated region
    $region2: #{attention_forward.1} parent=1 // pred_check
      _
    $region3: #{attention_forward.1} parent=1 // pred_check_branch
      %18 = sbr.rel (0) target = $region5
    $region4: #{attention_forward.1} parent=1 // pred_region
      _
    $region5: #{attention_forward.1} parent=1 // pred_fallthru
      _
    // Predicated region
    $region6: #{attention_forward.1} parent=1 // pred_check
      _
    $region7: #{attention_forward.1} parent=1 // pred_check_branch
      %20 = sbr.rel (0) target = $region9
    $region8: #{attention_forward.1} parent=1 // pred_region
      _
    $region9: #{attention_forward.1} parent=1 // pred_fallthru
      _
    // Predicated region
    $region10: #{attention_forward.1} parent=1 // pred_check
      _
    $region11: #{attention_forward.1} parent=1 // pred_check_branch
      %22 = sbr.rel (0) target = $region13
    $region12: #{attention_forward.1} parent=1 // pred_region
      _
    $region13: #{attention_forward.1} parent=1 // pred_fallthru
      _
    // Predicated region
    $region14: #{attention_forward.1} parent=1 // pred_check
      _
    $region15: #{attention_forward.1} parent=1 // pred_check_branch
      %24 = sbr.rel (0) target = $region17
    $region16: #{attention_forward.1} parent=1 // pred_region
      _
    $region17: #{attention_forward.1} parent=1 // pred_fallthru
      _
    // Predicated region
    $region18: #{attention_forward.1} parent=1 // pred_check
      _
    $region19: #{attention_forward.1} parent=1 // pred_check_branch
      %26 = sbr.rel (0) target = $region21
    $region20: #{attention_forward.1} parent=1 // pred_region
      %28 = vsyncadd [#allocation4], 0
      %s29 = sshll.u32 %s4, 4
      %s30 = int_to_ptr.hbm [resolvable:$true] %s29
      %s31 = sshll.u32 [#allocation3], 4
      %s32 = int_to_ptr.vmem [resolvable:$true] %s31
      %37 = dma.hbm_to_vmem [thread:$0]  %s30, 2048, %s32, [#allocation4], 128, 128, 8
    $region21: #{attention_forward.1} parent=1 // pred_fallthru
      _
    // Predicated region
    $region22: #{attention_forward.1} parent=1 // pred_check
      _
    $region23: #{attention_forward.1} parent=1 // pred_check_branch
      %39 = sbr.rel (0) target = $region25
    $region24: #{attention_forward.1} parent=1 // pred_region
      _
    $region25: #{attention_forward.1} parent=1 // pred_fallthru
      _
    // Predicated region
    $region26: #{attention_forward.1} parent=1 // pred_check
      _
    $region27: #{attention_forward.1} parent=1 // pred_check_branch
      %41 = sbr.rel (0) target = $region29
    $region28: #{attention_forward.1} parent=1 // pred_region
      _
    $region29: #{attention_forward.1} parent=1 // pred_fallthru
      _
    // Predicated region
    $region30: #{attention_forward.1} parent=1 // pred_check
      _
    $region31: #{attention_forward.1} parent=1 // pred_check_branch
      %43 = sbr.rel (0) target = $region33
    $region32: #{attention_forward.1} parent=1 // pred_region
      _
    $region33: #{attention_forward.1} parent=1 // pred_fallthru
      _
    // Predicated region
    $region34: #{attention_forward.1} parent=1 // pred_check
      _
    $region35: #{attention_forward.1} parent=1 // pred_check_branch
      %45 = sbr.rel (0) target = $region37
    $region36: #{attention_forward.1} parent=1 // pred_region
      %47 = dma.done [#allocation4], 2048
    $region37: #{attention_forward.1} parent=1 // pred_fallthru
      _
    %v48 = vld [vmem:[%s1] sm:$0xff]
    %v49 = vld [vmem:[#allocation3] sm:$0xff]
    %v50 = vld [vmem:[#allocation3 + $0x8] sm:$0xff]
    %v51 = vld [vmem:[#allocation3 + $0x10] sm:$0xff]
    %v52 = vld [vmem:[#allocation3 + $0x18] sm:$0xff]
    %v53 = vld [vmem:[#allocation3 + $0x20] sm:$0xff]
    %v54 = vld [vmem:[#allocation3 + $0x28] sm:$0xff]
    %v55 = vld [vmem:[#allocation3 + $0x30] sm:$0xff]
    %v56 = vld [vmem:[#allocation3 + $0x38] sm:$0xff]
    %v57 = vld [vmem:[#allocation3 + $0x40] sm:$0xff]
    %v58 = vld [vmem:[#allocation3 + $0x48] sm:$0xff]
    %v59 = vld [vmem:[#allocation3 + $0x50] sm:$0xff]
    %v60 = vld [vmem:[#allocation3 + $0x58] sm:$0xff]
    %v61 = vld [vmem:[#allocation3 + $0x60] sm:$0xff]
    %v62 = vld [vmem:[#allocation3 + $0x68] sm:$0xff]
    %v63 = vld [vmem:[#allocation3 + $0x70] sm:$0xff]
    %v64 = vld [vmem:[#allocation3 + $0x78] sm:$0xff]
    %v65 = vld [vmem:[%s5] sm:$0x1]
    %v67 = vperm.slane %v65, 0
    %69 = vmatpush.msra.mxu0 %v64
    %70 = vmatpush.msra.mxu0 %v63
    %71 = vmatpush.msra.mxu0 %v62
    %72 = vmatpush.msra.mxu0 %v61
    %73 = vmatpush.msra.mxu0 %v60
    %74 = vmatpush.msra.mxu0 %v59
    %75 = vmatpush.msra.mxu0 %v58
    %76 = vmatpush.msra.mxu0 %v57
    %77 = vmatpush.msra.mxu0 %v56
    %78 = vmatpush.msra.mxu0 %v55
    %79 = vmatpush.msra.mxu0 %v54
    %80 = vmatpush.msra.mxu0 %v53
    %81 = vmatpush.msra.mxu0 %v52
    %82 = vmatpush.msra.mxu0 %v51
    %83 = vmatpush.msra.mxu0 %v50
    %84 = vmatpush.msra.mxu0 %v49
    %85 = vmatmul.f32.gmra.mxu0 %v48
    %v86 = vpop.f32.mrf.mxu0
    %v87 = vadd.f32 %v67, %v86
    %88 = vdwg.mxu0
    %v89 = vld [vmem:[%s0] sm:$0xff]
    %v90 = vld [vmem:[%s0 + $0x8] sm:$0xff]
    %v91 = vld [vmem:[%s0 + $0x10] sm:$0xff]
    %v92 = vld [vmem:[%s0 + $0x18] sm:$0xff]
    %v93 = vld [vmem:[%s0 + $0x20] sm:$0xff]
    %v94 = vld [vmem:[%s0 + $0x28] sm:$0xff]
    %v95 = vld [vmem:[%s0 + $0x30] sm:$0xff]
    %v96 = vld [vmem:[%s0 + $0x38] sm:$0xff]
    %v97 = vld [vmem:[%s0 + $0x40] sm:$0xff]
    %v98 = vld [vmem:[%s0 + $0x48] sm:$0xff]
    %v99 = vld [vmem:[%s0 + $0x50] sm:$0xff]
    %v100 = vld [vmem:[%s0 + $0x58] sm:$0xff]
    %v101 = vld [vmem:[%s0 + $0x60] sm:$0xff]
    %v102 = vld [vmem:[%s0 + $0x68] sm:$0xff]
    %v103 = vld [vmem:[%s0 + $0x70] sm:$0xff]
    %v104 = vld [vmem:[%s0 + $0x78] sm:$0xff]
    %v105 = vld [vmem:[%s2] sm:$0xff]
    %v106 = vld [vmem:[%s2 + $0x8] sm:$0xff]
    %v107 = vld [vmem:[%s2 + $0x10] sm:$0xff]
    %v108 = vld [vmem:[%s2 + $0x18] sm:$0xff]
    %v109 = vld [vmem:[%s2 + $0x20] sm:$0xff]
    %v110 = vld [vmem:[%s2 + $0x28] sm:$0xff]
    %v111 = vld [vmem:[%s2 + $0x30] sm:$0xff]
    %v112 = vld [vmem:[%s2 + $0x38] sm:$0xff]
    %v113 = vld [vmem:[%s2 + $0x40] sm:$0xff]
    %v114 = vld [vmem:[%s2 + $0x48] sm:$0xff]
    %v115 = vld [vmem:[%s2 + $0x50] sm:$0xff]
    %v116 = vld [vmem:[%s2 + $0x58] sm:$0xff]
    %v117 = vld [vmem:[%s2 + $0x60] sm:$0xff]
    %v118 = vld [vmem:[%s2 + $0x68] sm:$0xff]
    %v119 = vld [vmem:[%s2 + $0x70] sm:$0xff]
    %v120 = vld [vmem:[%s2 + $0x78] sm:$0xff]
    %121 = vmatpush.msra.mxu0 %v120
    %122 = vmatpush.msra.mxu0 %v119
    %123 = vmatpush.msra.mxu0 %v118
    %124 = vmatpush.msra.mxu0 %v117
    %125 = vmatpush.msra.mxu0 %v116
    %126 = vmatpush.msra.mxu0 %v115
    %127 = vmatpush.msra.mxu0 %v114
    %128 = vmatpush.msra.mxu0 %v113
    %129 = vmatpush.msra.mxu0 %v112
    %130 = vmatpush.msra.mxu0 %v111
    %131 = vmatpush.msra.mxu0 %v110
    %132 = vmatpush.msra.mxu0 %v109
    %133 = vmatpush.msra.mxu0 %v108
    %134 = vmatpush.msra.mxu0 %v107
    %135 = vmatpush.msra.mxu0 %v106
    %136 = vmatpush.msra.mxu0 %v105
    %137 = vmatmul.f32.gmra.mxu0 %v89
    %v138 = vpop.f32.mrf.mxu0
    %v139 = vadd.f32 0.0, %v138
    %140 = vmatmul.f32.gmra.mxu0 %v90
    %v141 = vpop.f32.mrf.mxu0
    %v142 = vadd.f32 0.0, %v141
    %143 = vmatmul.f32.gmra.mxu0 %v91
    %v144 = vpop.f32.mrf.mxu0
    %v145 = vadd.f32 0.0, %v144
    %146 = vmatmul.f32.gmra.mxu0 %v92
    %v147 = vpop.f32.mrf.mxu0
    %v148 = vadd.f32 0.0, %v147
    %149 = vmatmul.f32.gmra.mxu0 %v93
    %v150 = vpop.f32.mrf.mxu0
    %v151 = vadd.f32 0.0, %v150
    %152 = vmatmul.f32.gmra.mxu0 %v94
    %v153 = vpop.f32.mrf.mxu0
    %v154 = vadd.f32 0.0, %v153
    %155 = vmatmul.f32.gmra.mxu0 %v95
    %v156 = vpop.f32.mrf.mxu0
    %v157 = vadd.f32 0.0, %v156
    %158 = vmatmul.f32.gmra.mxu0 %v96
    %v159 = vpop.f32.mrf.mxu0
    %v160 = vadd.f32 0.0, %v159
    %161 = vmatmul.f32.gmra.mxu0 %v97
    %v162 = vpop.f32.mrf.mxu0
    %v163 = vadd.f32 0.0, %v162
    %164 = vmatmul.f32.gmra.mxu0 %v98
    %v165 = vpop.f32.mrf.mxu0
    %v166 = vadd.f32 0.0, %v165
    %167 = vmatmul.f32.gmra.mxu0 %v99
    %v168 = vpop.f32.mrf.mxu0
    %v169 = vadd.f32 0.0, %v168
    %170 = vmatmul.f32.gmra.mxu0 %v100
    %v171 = vpop.f32.mrf.mxu0
    %v172 = vadd.f32 0.0, %v171
    %173 = vmatmul.f32.gmra.mxu0 %v101
    %v174 = vpop.f32.mrf.mxu0
    %v175 = vadd.f32 0.0, %v174
    %176 = vmatmul.f32.gmra.mxu0 %v102
    %v177 = vpop.f32.mrf.mxu0
    %v178 = vadd.f32 0.0, %v177
    %179 = vmatmul.f32.gmra.mxu0 %v103
    %v180 = vpop.f32.mrf.mxu0
    %v181 = vadd.f32 0.0, %v180
    %182 = vmatmul.f32.gmra.mxu0 %v104
    %v183 = vpop.f32.mrf.mxu0
    %v184 = vadd.f32 0.0, %v183
    %185 = vdwg.mxu0
    %v186 = vld [vmem:[%s3] sm:$0x1]
    %v188 = vperm.slane %v186, 0
    %v190 = vadd.f32 %v139, %v188
    %v191 = vadd.f32 %v142, %v188
    %v192 = vadd.f32 %v145, %v188
    %v193 = vadd.f32 %v148, %v188
    %v194 = vadd.f32 %v151, %v188
    %v195 = vadd.f32 %v154, %v188
    %v196 = vadd.f32 %v157, %v188
    %v197 = vadd.f32 %v160, %v188
    %v198 = vadd.f32 %v163, %v188
    %v199 = vadd.f32 %v166, %v188
    %v200 = vadd.f32 %v169, %v188
    %v201 = vadd.f32 %v172, %v188
    %v202 = vadd.f32 %v175, %v188
    %v203 = vadd.f32 %v178, %v188
    %v204 = vadd.f32 %v181, %v188
    %v205 = vadd.f32 %v184, %v188
    %v207 = vrot.slane %v87, 1
    %v208 = vrot.slane %v87, 2
    %v209 = vrot.slane %v87, 3
    %v210 = vrot.slane %v87, 4
    %v211 = vrot.slane %v87, 5
    %v212 = vrot.slane %v87, 6
    %v213 = vrot.slane %v87, 7
    %v214 = vperm.slane %v87, 0
    %v215 = vperm.slane %v207, 0
    %v216 = vperm.slane %v208, 0
    %v217 = vperm.slane %v209, 0
    %v218 = vperm.slane %v210, 0
    %v219 = vperm.slane %v211, 0
    %v220 = vperm.slane %v212, 0
    %v221 = vperm.slane %v213, 0
    %v230 = vadd.f32 %v190, %v214
    %v231 = vadd.f32 %v191, %v214
    %v232 = vadd.f32 %v192, %v215
    %v233 = vadd.f32 %v193, %v215
    %v234 = vadd.f32 %v194, %v216
    %v235 = vadd.f32 %v195, %v216
    %v236 = vadd.f32 %v196, %v217
    %v237 = vadd.f32 %v197, %v217
    %v238 = vadd.f32 %v198, %v218
    %v239 = vadd.f32 %v199, %v218
    %v240 = vadd.f32 %v200, %v219
    %v241 = vadd.f32 %v201, %v219
    %v242 = vadd.f32 %v202, %v220
    %v243 = vadd.f32 %v203, %v220
    %v244 = vadd.f32 %v204, %v221
    %v245 = vadd.f32 %v205, %v221
    %v246 = vmax.f32 %v230, 0.0
    %v247 = vmax.f32 %v231, 0.0
    %v248 = vmax.f32 %v232, 0.0
    %v249 = vmax.f32 %v233, 0.0
    %v250 = vmax.f32 %v234, 0.0
    %v251 = vmax.f32 %v235, 0.0
    %v252 = vmax.f32 %v236, 0.0
    %v253 = vmax.f32 %v237, 0.0
    %v254 = vmax.f32 %v238, 0.0
    %v255 = vmax.f32 %v239, 0.0
    %v256 = vmax.f32 %v240, 0.0
    %v257 = vmax.f32 %v241, 0.0
    %v258 = vmax.f32 %v242, 0.0
    %v259 = vmax.f32 %v243, 0.0
    %v260 = vmax.f32 %v244, 0.0
    %v261 = vmax.f32 %v245, 0.0
    %v262 = vld [vmem:[%s6] sm:$0x1]
    %v264 = vperm.slane %v262, 0
    %v266 = vmul.f32 %v246, %v264
    %v267 = vmul.f32 %v247, %v264
    %v268 = vmul.f32 %v248, %v264
    %v269 = vmul.f32 %v249, %v264
    %v270 = vmul.f32 %v250, %v264
    %v271 = vmul.f32 %v251, %v264
    %v272 = vmul.f32 %v252, %v264
    %v273 = vmul.f32 %v253, %v264
    %v274 = vmul.f32 %v254, %v264
    %v275 = vmul.f32 %v255, %v264
    %v276 = vmul.f32 %v256, %v264
    %v277 = vmul.f32 %v257, %v264
    %v278 = vmul.f32 %v258, %v264
    %v279 = vmul.f32 %v259, %v264
    %v280 = vmul.f32 %v260, %v264
    %v281 = vmul.f32 %v261, %v264
    %282 = vadd.xlane.f32.xlu0 %v266
    %v283 = vpop.xlane.xlu0 %282
    %284 = vadd.xlane.f32.xlu0 %v267
    %v285 = vpop.xlane.xlu0 %284
    %286 = vadd.xlane.f32.xlu0 %v268
    %v287 = vpop.xlane.xlu0 %286
    %288 = vadd.xlane.f32.xlu0 %v269
    %v289 = vpop.xlane.xlu0 %288
    %290 = vadd.xlane.f32.xlu0 %v270
    %v291 = vpop.xlane.xlu0 %290
    %292 = vadd.xlane.f32.xlu0 %v271
    %v293 = vpop.xlane.xlu0 %292
    %294 = vadd.xlane.f32.xlu0 %v272
    %v295 = vpop.xlane.xlu0 %294
    %296 = vadd.xlane.f32.xlu0 %v273
    %v297 = vpop.xlane.xlu0 %296
    %298 = vadd.xlane.f32.xlu0 %v274
    %v299 = vpop.xlane.xlu0 %298
    %300 = vadd.xlane.f32.xlu0 %v275
    %v301 = vpop.xlane.xlu0 %300
    %302 = vadd.xlane.f32.xlu0 %v276
    %v303 = vpop.xlane.xlu0 %302
    %304 = vadd.xlane.f32.xlu0 %v277
    %v305 = vpop.xlane.xlu0 %304
    %306 = vadd.xlane.f32.xlu0 %v278
    %v307 = vpop.xlane.xlu0 %306
    %308 = vadd.xlane.f32.xlu0 %v279
    %v309 = vpop.xlane.xlu0 %308
    %310 = vadd.xlane.f32.xlu0 %v280
    %v311 = vpop.xlane.xlu0 %310
    %312 = vadd.xlane.f32.xlu0 %v281
    %v313 = vpop.xlane.xlu0 %312
    %v314 = vadd.f32 %v283, 0.0
    %v315 = vadd.f32 %v285, 0.0
    %v316 = vadd.f32 %v287, 0.0
    %v317 = vadd.f32 %v289, 0.0
    %v318 = vadd.f32 %v291, 0.0
    %v319 = vadd.f32 %v293, 0.0
    %v320 = vadd.f32 %v295, 0.0
    %v321 = vadd.f32 %v297, 0.0
    %v322 = vadd.f32 %v299, 0.0
    %v323 = vadd.f32 %v301, 0.0
    %v324 = vadd.f32 %v303, 0.0
    %v325 = vadd.f32 %v305, 0.0
    %v326 = vadd.f32 %v307, 0.0
    %v327 = vadd.f32 %v309, 0.0
    %v328 = vadd.f32 %v311, 0.0
    %v329 = vadd.f32 %v313, 0.0
    %s330 = sld [smem:[#allocation2]]
    %v331 = vstv %s330
    %v332 = vadd.f32 %v314, %v331
    %v333 = vadd.f32 %v315, %v331
    %v334 = vadd.f32 %v316, %v331
    %v335 = vadd.f32 %v317, %v331
    %v336 = vadd.f32 %v318, %v331
    %v337 = vadd.f32 %v319, %v331
    %v338 = vadd.f32 %v320, %v331
    %v339 = vadd.f32 %v321, %v331
    %v340 = vadd.f32 %v322, %v331
    %v341 = vadd.f32 %v323, %v331
    %v342 = vadd.f32 %v324, %v331
    %v343 = vadd.f32 %v325, %v331
    %v344 = vadd.f32 %v326, %v331
    %v345 = vadd.f32 %v327, %v331
    %v346 = vadd.f32 %v328, %v331
    %v347 = vadd.f32 %v329, %v331
    %v364 = vlaneseq
    %v365 = vand.u32 %v364, 127
    %v366 = vperm.slane %v332, %v365
    %v367 = vadd.s32 %v365, 4294967288
    %v368 = vperm.slane %v333, %v367
    %vm369 = vcmask 130112
    %v370 = vsel %vm369, %v368, %v366
    %v371 = vperm.slane %v334, %v365
    %v372 = vperm.slane %v335, %v367
    %v373 = vsel %vm369, %v372, %v371
    %v374 = vperm.slane %v336, %v365
    %v375 = vperm.slane %v337, %v367
    %v376 = vsel %vm369, %v375, %v374
    %v377 = vperm.slane %v338, %v365
    %v378 = vperm.slane %v339, %v367
    %v379 = vsel %vm369, %v378, %v377
    %v380 = vperm.slane %v340, %v365
    %v381 = vperm.slane %v341, %v367
    %v382 = vsel %vm369, %v381, %v380
    %v383 = vperm.slane %v342, %v365
    %v384 = vperm.slane %v343, %v367
    %v385 = vsel %vm369, %v384, %v383
    %v386 = vperm.slane %v344, %v365
    %v387 = vperm.slane %v345, %v367
    %v388 = vsel %vm369, %v387, %v386
    %v389 = vperm.slane %v346, %v365
    %v390 = vperm.slane %v347, %v367
    %v391 = vsel %vm369, %v390, %v389
    %vm392 = vcmask 1041409
    %v393 = vsel %vm392, %v373, %v370
    %vm394 = vcmask 1042434
    %v395 = vsel %vm394, %v376, %v393
    %vm396 = vcmask 1043459
    %v397 = vsel %vm396, %v379, %v395
    %vm398 = vcmask 1044484
    %v399 = vsel %vm398, %v382, %v397
    %vm400 = vcmask 1045509
    %v401 = vsel %vm400, %v385, %v399
    %vm402 = vcmask 1046534
    %v403 = vsel %vm402, %v388, %v401
    %vm404 = vcmask 1047559
    %v405 = vsel %vm404, %v391, %v403
    %vm407 = vcmask 130048
    %v408 = vsel %vm407, %v405, -inf
    %409 = vmax.xlane.f32.xlu0 %v408
    %v410 = vpop.xlane.xlu0 %409
    %v412 = vperm.slane %v410, 0
    %v413 = vperm.slane %v410, 1
    %v414 = vperm.slane %v410, 2
    %v415 = vperm.slane %v410, 3
    %v416 = vperm.slane %v410, 4
    %v417 = vperm.slane %v410, 5
    %v418 = vperm.slane %v410, 6
    %v419 = vperm.slane %v410, 7
    %v428 = vsub.f32 %v332, %v412
    %v429 = vsub.f32 %v333, %v412
    %v430 = vsub.f32 %v334, %v413
    %v431 = vsub.f32 %v335, %v413
    %v432 = vsub.f32 %v336, %v414
    %v433 = vsub.f32 %v337, %v414
    %v434 = vsub.f32 %v338, %v415
    %v435 = vsub.f32 %v339, %v415
    %v436 = vsub.f32 %v340, %v416
    %v437 = vsub.f32 %v341, %v416
    %v438 = vsub.f32 %v342, %v417
    %v439 = vsub.f32 %v343, %v417
    %v440 = vsub.f32 %v344, %v418
    %v441 = vsub.f32 %v345, %v418
    %v442 = vsub.f32 %v346, %v419
    %v443 = vsub.f32 %v347, %v419
    %v444 = vmul.f32 %v428, 1.442695
    %v445 = vpow.pop %v444
    %v446 = vmul.f32 %v429, 1.442695
    %v447 = vpow.pop %v446
    %v448 = vmul.f32 %v430, 1.442695
    %v449 = vpow.pop %v448
    %v450 = vmul.f32 %v431, 1.442695
    %v451 = vpow.pop %v450
    %v452 = vmul.f32 %v432, 1.442695
    %v453 = vpow.pop %v452
    %v454 = vmul.f32 %v433, 1.442695
    %v455 = vpow.pop %v454
    %v456 = vmul.f32 %v434, 1.442695
    %v457 = vpow.pop %v456
    %v458 = vmul.f32 %v435, 1.442695
    %v459 = vpow.pop %v458
    %v460 = vmul.f32 %v436, 1.442695
    %v461 = vpow.pop %v460
    %v462 = vmul.f32 %v437, 1.442695
    %v463 = vpow.pop %v462
    %v464 = vmul.f32 %v438, 1.442695
    %v465 = vpow.pop %v464
    %v466 = vmul.f32 %v439, 1.442695
    %v467 = vpow.pop %v466
    %v468 = vmul.f32 %v440, 1.442695
    %v469 = vpow.pop %v468
    %v470 = vmul.f32 %v441, 1.442695
    %v471 = vpow.pop %v470
    %v472 = vmul.f32 %v442, 1.442695
    %v473 = vpow.pop %v472
    %v474 = vmul.f32 %v443, 1.442695
    %v475 = vpow.pop %v474
    %492 = vset.pattern.permute.xlu0 0
    %493 = vperm.xlu0 %492, %v445
    %v494 = vpop.permute.xlu0 %493
    %495 = vset.pattern.permute.xlu0 0
    %496 = vperm.xlu0 %495, %v447
    %v497 = vpop.permute.xlu0 %496
    %498 = vset.pattern.permute.xlu0 0
    %499 = vperm.xlu0 %498, %v449
    %v500 = vpop.permute.xlu0 %499
    %501 = vset.pattern.permute.xlu0 0
    %502 = vperm.xlu0 %501, %v451
    %v503 = vpop.permute.xlu0 %502
    %504 = vset.pattern.permute.xlu0 0
    %505 = vperm.xlu0 %504, %v453
    %v506 = vpop.permute.xlu0 %505
    %507 = vset.pattern.permute.xlu0 0
    %508 = vperm.xlu0 %507, %v455
    %v509 = vpop.permute.xlu0 %508
    %510 = vset.pattern.permute.xlu0 0
    %511 = vperm.xlu0 %510, %v457
    %v512 = vpop.permute.xlu0 %511
    %513 = vset.pattern.permute.xlu0 0
    %514 = vperm.xlu0 %513, %v459
    %v515 = vpop.permute.xlu0 %514
    %516 = vset.pattern.permute.xlu0 0
    %517 = vperm.xlu0 %516, %v461
    %v518 = vpop.permute.xlu0 %517
    %519 = vset.pattern.permute.xlu0 0
    %520 = vperm.xlu0 %519, %v463
    %v521 = vpop.permute.xlu0 %520
    %522 = vset.pattern.permute.xlu0 0
    %523 = vperm.xlu0 %522, %v465
    %v524 = vpop.permute.xlu0 %523
    %525 = vset.pattern.permute.xlu0 0
    %526 = vperm.xlu0 %525, %v467
    %v527 = vpop.permute.xlu0 %526
    %528 = vset.pattern.permute.xlu0 0
    %529 = vperm.xlu0 %528, %v469
    %v530 = vpop.permute.xlu0 %529
    %531 = vset.pattern.permute.xlu0 0
    %532 = vperm.xlu0 %531, %v471
    %v533 = vpop.permute.xlu0 %532
    %534 = vset.pattern.permute.xlu0 0
    %535 = vperm.xlu0 %534, %v473
    %v536 = vpop.permute.xlu0 %535
    %537 = vset.pattern.permute.xlu0 0
    %538 = vperm.xlu0 %537, %v475
    %v539 = vpop.permute.xlu0 %538
    %v540 = vperm.slane %v494, %v365
    %v541 = vperm.slane %v497, %v367
    %v542 = vsel %vm369, %v541, %v540
    %v543 = vperm.slane %v500, %v365
    %v544 = vperm.slane %v503, %v367
    %v545 = vsel %vm369, %v544, %v543
    %v546 = vperm.slane %v506, %v365
    %v547 = vperm.slane %v509, %v367
    %v548 = vsel %vm369, %v547, %v546
    %v549 = vperm.slane %v512, %v365
    %v550 = vperm.slane %v515, %v367
    %v551 = vsel %vm369, %v550, %v549
    %v552 = vperm.slane %v518, %v365
    %v553 = vperm.slane %v521, %v367
    %v554 = vsel %vm369, %v553, %v552
    %v555 = vperm.slane %v524, %v365
    %v556 = vperm.slane %v527, %v367
    %v557 = vsel %vm369, %v556, %v555
    %v558 = vperm.slane %v530, %v365
    %v559 = vperm.slane %v533, %v367
    %v560 = vsel %vm369, %v559, %v558
    %v561 = vperm.slane %v536, %v365
    %v562 = vperm.slane %v539, %v367
    %v563 = vsel %vm369, %v562, %v561
    %v564 = vsel %vm392, %v545, %v542
    %v565 = vsel %vm394, %v548, %v564
    %v566 = vsel %vm396, %v551, %v565
    %v567 = vsel %vm398, %v554, %v566
    %v568 = vsel %vm400, %v557, %v567
    %v569 = vsel %vm402, %v560, %v568
    %v570 = vsel %vm404, %v563, %v569
    %v572 = vsel %vm407, %v570, 0.0
    %573 = vadd.xlane.f32.xlu0 %v572
    %v574 = vpop.xlane.xlu0 %573
    %v575 = vrcp.pop %v574
    %v577 = vperm.slane %v575, 0
    %v578 = vperm.slane %v575, 1
    %v579 = vperm.slane %v575, 2
    %v580 = vperm.slane %v575, 3
    %v581 = vperm.slane %v575, 4
    %v582 = vperm.slane %v575, 5
    %v583 = vperm.slane %v575, 6
    %v584 = vperm.slane %v575, 7
    %v593 = vmul.f32 %v445, %v577
    %v594 = vmul.f32 %v447, %v577
    %v595 = vmul.f32 %v449, %v578
    %v596 = vmul.f32 %v451, %v578
    %v597 = vmul.f32 %v453, %v579
    %v598 = vmul.f32 %v455, %v579
    %v599 = vmul.f32 %v457, %v580
    %v600 = vmul.f32 %v459, %v580
    %v601 = vmul.f32 %v461, %v581
    %v602 = vmul.f32 %v463, %v581
    %v603 = vmul.f32 %v465, %v582
    %v604 = vmul.f32 %v467, %v582
    %v605 = vmul.f32 %v469, %v583
    %v606 = vmul.f32 %v471, %v583
    %v607 = vmul.f32 %v473, %v584
    %v608 = vmul.f32 %v475, %v584
    %625 = vset.pattern.permute.xlu0 0
    %626 = vperm.xlu0 %625, %v593
    %v627 = vpop.permute.xlu0 %626
    %628 = vset.pattern.permute.xlu0 0
    %629 = vperm.xlu0 %628, %v594
    %v630 = vpop.permute.xlu0 %629
    %631 = vset.pattern.permute.xlu0 0
    %632 = vperm.xlu0 %631, %v595
    %v633 = vpop.permute.xlu0 %632
    %634 = vset.pattern.permute.xlu0 0
    %635 = vperm.xlu0 %634, %v596
    %v636 = vpop.permute.xlu0 %635
    %637 = vset.pattern.permute.xlu0 0
    %638 = vperm.xlu0 %637, %v597
    %v639 = vpop.permute.xlu0 %638
    %640 = vset.pattern.permute.xlu0 0
    %641 = vperm.xlu0 %640, %v598
    %v642 = vpop.permute.xlu0 %641
    %643 = vset.pattern.permute.xlu0 0
    %644 = vperm.xlu0 %643, %v599
    %v645 = vpop.permute.xlu0 %644
    %646 = vset.pattern.permute.xlu0 0
    %647 = vperm.xlu0 %646, %v600
    %v648 = vpop.permute.xlu0 %647
    %649 = vset.pattern.permute.xlu0 0
    %650 = vperm.xlu0 %649, %v601
    %v651 = vpop.permute.xlu0 %650
    %652 = vset.pattern.permute.xlu0 0
    %653 = vperm.xlu0 %652, %v602
    %v654 = vpop.permute.xlu0 %653
    %655 = vset.pattern.permute.xlu0 0
    %656 = vperm.xlu0 %655, %v603
    %v657 = vpop.permute.xlu0 %656
    %658 = vset.pattern.permute.xlu0 0
    %659 = vperm.xlu0 %658, %v604
    %v660 = vpop.permute.xlu0 %659
    %661 = vset.pattern.permute.xlu0 0
    %662 = vperm.xlu0 %661, %v605
    %v663 = vpop.permute.xlu0 %662
    %664 = vset.pattern.permute.xlu0 0
    %665 = vperm.xlu0 %664, %v606
    %v666 = vpop.permute.xlu0 %665
    %667 = vset.pattern.permute.xlu0 0
    %668 = vperm.xlu0 %667, %v607
    %v669 = vpop.permute.xlu0 %668
    %670 = vset.pattern.permute.xlu0 0
    %671 = vperm.xlu0 %670, %v608
    %v672 = vpop.permute.xlu0 %671
    %v673 = vperm.slane %v627, %v365
    %v674 = vperm.slane %v630, %v367
    %v675 = vsel %vm369, %v674, %v673
    %v676 = vperm.slane %v633, %v365
    %v677 = vperm.slane %v636, %v367
    %v678 = vsel %vm369, %v677, %v676
    %v679 = vperm.slane %v639, %v365
    %v680 = vperm.slane %v642, %v367
    %v681 = vsel %vm369, %v680, %v679
    %v682 = vperm.slane %v645, %v365
    %v683 = vperm.slane %v648, %v367
    %v684 = vsel %vm369, %v683, %v682
    %v685 = vperm.slane %v651, %v365
    %v686 = vperm.slane %v654, %v367
    %v687 = vsel %vm369, %v686, %v685
    %v688 = vperm.slane %v657, %v365
    %v689 = vperm.slane %v660, %v367
    %v690 = vsel %vm369, %v689, %v688
    %v691 = vperm.slane %v663, %v365
    %v692 = vperm.slane %v666, %v367
    %v693 = vsel %vm369, %v692, %v691
    %v694 = vperm.slane %v669, %v365
    %v695 = vperm.slane %v672, %v367
    %v696 = vsel %vm369, %v695, %v694
    %v697 = vsel %vm392, %v678, %v675
    %v698 = vsel %vm394, %v681, %v697
    %v699 = vsel %vm396, %v684, %v698
    %v700 = vsel %vm398, %v687, %v699
    %v701 = vsel %vm400, %v690, %v700
    %v702 = vsel %vm402, %v693, %v701
    %v703 = vsel %vm404, %v696, %v702
    %705 = vst.msk [vmem:[%s9] sm:$0xff] %vm407, %v703
    %v706 = vld [vmem:[%s0] sm:$0xff]
    %v707 = vld [vmem:[%s0 + $0x8] sm:$0xff]
    %v708 = vld [vmem:[%s0 + $0x10] sm:$0xff]
    %v709 = vld [vmem:[%s0 + $0x18] sm:$0xff]
    %v710 = vld [vmem:[%s0 + $0x20] sm:$0xff]
    %v711 = vld [vmem:[%s0 + $0x28] sm:$0xff]
    %v712 = vld [vmem:[%s0 + $0x30] sm:$0xff]
    %v713 = vld [vmem:[%s0 + $0x38] sm:$0xff]
    %v714 = vld [vmem:[%s0 + $0x40] sm:$0xff]
    %v715 = vld [vmem:[%s0 + $0x48] sm:$0xff]
    %v716 = vld [vmem:[%s0 + $0x50] sm:$0xff]
    %v717 = vld [vmem:[%s0 + $0x58] sm:$0xff]
    %v718 = vld [vmem:[%s0 + $0x60] sm:$0xff]
    %v719 = vld [vmem:[%s0 + $0x68] sm:$0xff]
    %v720 = vld [vmem:[%s0 + $0x70] sm:$0xff]
    %v721 = vld [vmem:[%s0 + $0x78] sm:$0xff]
    %v738 = vmul.f32 %v706, %v627
    %v739 = vmul.f32 %v707, %v630
    %v740 = vmul.f32 %v708, %v633
    %v741 = vmul.f32 %v709, %v636
    %v742 = vmul.f32 %v710, %v639
    %v743 = vmul.f32 %v711, %v642
    %v744 = vmul.f32 %v712, %v645
    %v745 = vmul.f32 %v713, %v648
    %v746 = vmul.f32 %v714, %v651
    %v747 = vmul.f32 %v715, %v654
    %v748 = vmul.f32 %v716, %v657
    %v749 = vmul.f32 %v717, %v660
    %v750 = vmul.f32 %v718, %v663
    %v751 = vmul.f32 %v719, %v666
    %v752 = vmul.f32 %v720, %v669
    %v753 = vmul.f32 %v721, %v672
    %v754 = vadd.f32 %v738, %v739
    %v755 = vrot.slane %v754, 4
    %v756 = vadd.f32 %v754, %v755
    %v757 = vrot.slane %v756, 2
    %v758 = vadd.f32 %v756, %v757
    %v759 = vrot.slane %v758, 1
    %v760 = vadd.f32 %v758, %v759
    %v761 = vadd.f32 %v740, %v741
    %v762 = vrot.slane %v761, 4
    %v763 = vadd.f32 %v761, %v762
    %v764 = vrot.slane %v763, 2
    %v765 = vadd.f32 %v763, %v764
    %v766 = vrot.slane %v765, 1
    %v767 = vadd.f32 %v765, %v766
    %v768 = vadd.f32 %v742, %v743
    %v769 = vrot.slane %v768, 4
    %v770 = vadd.f32 %v768, %v769
    %v771 = vrot.slane %v770, 2
    %v772 = vadd.f32 %v770, %v771
    %v773 = vrot.slane %v772, 1
    %v774 = vadd.f32 %v772, %v773
    %v775 = vadd.f32 %v744, %v745
    %v776 = vrot.slane %v775, 4
    %v777 = vadd.f32 %v775, %v776
    %v778 = vrot.slane %v777, 2
    %v779 = vadd.f32 %v777, %v778
    %v780 = vrot.slane %v779, 1
    %v781 = vadd.f32 %v779, %v780
    %v782 = vadd.f32 %v746, %v747
    %v783 = vrot.slane %v782, 4
    %v784 = vadd.f32 %v782, %v783
    %v785 = vrot.slane %v784, 2
    %v786 = vadd.f32 %v784, %v785
    %v787 = vrot.slane %v786, 1
    %v788 = vadd.f32 %v786, %v787
    %v789 = vadd.f32 %v748, %v749
    %v790 = vrot.slane %v789, 4
    %v791 = vadd.f32 %v789, %v790
    %v792 = vrot.slane %v791, 2
    %v793 = vadd.f32 %v791, %v792
    %v794 = vrot.slane %v793, 1
    %v795 = vadd.f32 %v793, %v794
    %v796 = vadd.f32 %v750, %v751
    %v797 = vrot.slane %v796, 4
    %v798 = vadd.f32 %v796, %v797
    %v799 = vrot.slane %v798, 2
    %v800 = vadd.f32 %v798, %v799
    %v801 = vrot.slane %v800, 1
    %v802 = vadd.f32 %v800, %v801
    %v803 = vadd.f32 %v752, %v753
    %v804 = vrot.slane %v803, 4
    %v805 = vadd.f32 %v803, %v804
    %v806 = vrot.slane %v805, 2
    %v807 = vadd.f32 %v805, %v806
    %v808 = vrot.slane %v807, 1
    %v809 = vadd.f32 %v807, %v808
    %v818 = vsel %vm392, %v767, %v760
    %v819 = vsel %vm394, %v774, %v818
    %v820 = vsel %vm396, %v781, %v819
    %v821 = vsel %vm398, %v788, %v820
    %v822 = vsel %vm400, %v795, %v821
    %v823 = vsel %vm402, %v802, %v822
    %v824 = vsel %vm404, %v809, %v823
    %826 = vst [vmem:[%s8] sm:$0xff] %v824
    // Predicated region
    $region38: #{attention_forward.1} parent=1 // pred_check
      _
    $region39: #{attention_forward.1} parent=1 // pred_check_branch
      %828 = sbr.rel (0) target = $region41
    $region40: #{attention_forward.1} parent=1 // pred_region
      _
    $region41: #{attention_forward.1} parent=1 // pred_fallthru
      _
    // Predicated region
    $region42: #{attention_forward.1} parent=1 // pred_check
      _
    $region43: #{attention_forward.1} parent=1 // pred_check_branch
      %830 = sbr.rel (0) target = $region45
    $region44: #{attention_forward.1} parent=1 // pred_region
      _
    $region45: #{attention_forward.1} parent=1 // pred_fallthru
      _
    // Predicated region
    $region46: #{attention_forward.1} parent=1 // pred_check
      _
    $region47: #{attention_forward.1} parent=1 // pred_check_branch
      %832 = sbr.rel (0) target = $region49
    $region48: #{attention_forward.1} parent=1 // pred_region
      _
    $region49: #{attention_forward.1} parent=1 // pred_fallthru
      _
    // Predicated region
    $region50: #{attention_forward.1} parent=1 // pred_check
      _
    $region51: #{attention_forward.1} parent=1 // pred_check_branch
      %834 = sbr.rel (0) target = $region53
    $region52: #{attention_forward.1} parent=1 // pred_region
      _
    $region53: #{attention_forward.1} parent=1 // pred_fallthru
      _
    %835 = vsyncpa [#allocation4], 1

</llo_original>
